<compile_context>
chip_gen: v7x
topology: tpu7x:2x2x1
jax: 0.10.0
libtpu: 0.0.40
codegen_flags: <defaults>
</compile_context>

<pallas_src>
import functools

import jax
import jax.numpy as jnp
from jax import lax
from jax.experimental import pallas as pl
from jax.experimental.pallas import tpu as pltpu

_LANES = 128
_SUBLANES = 8
_SMALL_MAX_ELEMS = 16 * 1024      # <= this: single full-extent block path
_DEFAULT_TILE_ROWS = 2048          # (2048, 128) f32 = 1 MiB per block
_MAX_TILE_ROWS = 8192              # 4 MiB block cap (v5e scoped-VMEM safe)
_NUM_SLICES = 2                    # parallel slices (both TensorCores on v7x)


def _cdiv(a: int, b: int) -> int:
    return -(-a // b)


def _round_up(a: int, b: int) -> int:
    return _cdiv(a, b) * b


def _as_2d(q: jax.Array) -> jax.Array:
    """Free (metadata-only) 2-D view of q for the small path."""
    if q.ndim == 0:
        return q.reshape(1, 1)
    if q.ndim == 1:
        return q.reshape(1, q.shape[0])
    if q.ndim == 2:
        return q
    return q.reshape(-1, q.shape[-1])


def _single_block_kernel(q_ref, out_ref, *, inv_neg_n: float):
    """Whole array in one VMEM block: one reduce + scale, scalar to SMEM."""
    out_ref[0, 0] = jnp.sum(q_ref[...].astype(jnp.float32)) * inv_neg_n


def _tiled_partial_sum_kernel(q_ref, out_ref, *, tile_rows: int,
                              steps_per_slice: int, valid_rows: int,
                              need_mask: bool):
    """Streaming partial-sum reduction.

    q_ref   : (tile_rows, 128) lane-dense input block
    out_ref : (8, 128) f32 partial sums for this slice; resident across the
              sequential axis (same block index for every step), written back
              to HBM once per slice.
    """
    c = pl.program_id(0)   # parallel slice (TensorCore on v7x)
    s = pl.program_id(1)   # sequential step within the slice

    @pl.when(s == 0)
    def _init():
        out_ref[...] = jnp.zeros_like(out_ref)

    x = q_ref[...].astype(jnp.float32)
    if need_mask:
        # Zero every element whose global row is past the real array: the
        # tail block's out-of-bounds rows contain unspecified data.
        base_row = (c * steps_per_slice + s) * tile_rows
        row = base_row + lax.broadcasted_iota(jnp.int32, x.shape, 0)
        x = jnp.where(row < valid_rows, x, 0.0)

    # (tile_rows,128) -> (tile_rows//8, 8, 128) is vreg-granular (free); the
    # axis-0 sum is pure cross-vreg VPU adds into a single (8,128) vreg.
    out_ref[...] += x.reshape(-1, _SUBLANES, _LANES).sum(axis=0)


def policy_loss(q_value: jax.Array, *, tile_rows: int = _DEFAULT_TILE_ROWS,
                small_max_elems: int = _SMALL_MAX_ELEMS) -> jax.Array:
    """Pallas TPU PolicyLoss: returns -mean(q_value) as a scalar."""
    total_n = int(q_value.size)
    assert total_n > 0, "q_value must be non-empty"
    out_dtype = q_value.dtype

    # ---- Small / typical DDPG path: one full-extent block, zero wrapper ops.
    if total_n <= small_max_elems:
        q2d = _as_2d(q_value)
        kernel = functools.partial(_single_block_kernel,
                                   inv_neg_n=-1.0 / float(total_n))
        out = pl.pallas_call(
            kernel,
            out_shape=jax.ShapeDtypeStruct((1, 1), jnp.float32),
            grid_spec=pltpu.PrefetchScalarGridSpec(
                num_scalar_prefetch=0,
                grid=(1,),
                in_specs=[pl.BlockSpec(q2d.shape, lambda i: (0, 0))],
                out_specs=pl.BlockSpec(memory_space=pltpu.SMEM),
            ),
            compiler_params=pltpu.CompilerParams(
                dimension_semantics=("arbitrary",)),
        )(q2d)
        return out[0, 0].astype(out_dtype)

    # ---- Large path: lane-dense streaming reduction.
    rows = _cdiv(total_n, _LANES)
    flat = q_value.reshape(-1)
    lane_pad = rows * _LANES - total_n
    if lane_pad:
        # Only when size % 128 != 0.  Zero padding keeps the sum exact (the
        # divisor stays the true element count).  When size % 128 == 0 the
        # reshape below is metadata-only and no HBM copy happens at all.
        flat = jnp.pad(flat, (0, lane_pad))
    q2d = flat.reshape(rows, _LANES)

    tile_rows = max(_SUBLANES,
                    min(_round_up(tile_rows, _SUBLANES), _MAX_TILE_ROWS))
    tile_rows = min(tile_rows, _round_up(rows, _SUBLANES))
    nblocks = _cdiv(rows, tile_rows)

    # Use both TensorCores (v7x) only when the block count splits evenly so
    # every block index stays in bounds; otherwise one sequential slice.
    num_slices = _NUM_SLICES if nblocks % _NUM_SLICES == 0 else 1
    steps = nblocks // num_slices
    need_mask = (rows % tile_rows) != 0

    kernel = functools.partial(
        _tiled_partial_sum_kernel, tile_rows=tile_rows, steps_per_slice=steps,
        valid_rows=rows, need_mask=need_mask)

    partials = pl.pallas_call(
        kernel,
        out_shape=jax.ShapeDtypeStruct((num_slices * _SUBLANES, _LANES),
                                       jnp.float32),
        grid_spec=pltpu.PrefetchScalarGridSpec(
            num_scalar_prefetch=0,
            grid=(num_slices, steps),
            in_specs=[pl.BlockSpec((tile_rows, _LANES),
                                   lambda c, s: (c * steps + s, 0))],
            out_specs=pl.BlockSpec((_SUBLANES, _LANES), lambda c, s: (c, 0)),
        ),
        compiler_params=pltpu.CompilerParams(
            dimension_semantics=("parallel", "arbitrary")),
    )(q2d)

    # Tiny epilogue: fold the (num_slices*8, 128) partials and scale by -1/N.
    return (jnp.sum(partials) * (-1.0 / float(total_n))).astype(out_dtype)


if __name__ == "__main__":
    key = jax.random.PRNGKey(0)
    k1, k2, k3, k4, k5 = jax.random.split(key, 5)

    # 1) Typical DDPG critic output (batch, 1): small single-block path.
    q1 = jax.random.normal(k1, (64, 1), dtype=jnp.float32)
    loss1 = policy_loss(q1)
    jax.block_until_ready(loss1)
    ref1 = -jnp.mean(q1)
    assert jnp.allclose(loss1, ref1, atol=1e-6, rtol=1e-6), (loss1, ref1)

    # 2) >2-D input through the small path (natural-view full block).
    q2 = jax.random.normal(k2, (2, 4, 16, 16), dtype=jnp.float32)
    loss2 = policy_loss(q2)
    jax.block_until_ready(loss2)
    ref2 = -jnp.mean(q2)
    assert jnp.allclose(loss2, ref2, atol=1e-6, rtol=1e-6), (loss2, ref2)

    # 3) Tiled path: odd block count (1 slice), lane pad + tail-row masking.
    q3 = jax.random.normal(k3, (2500, 1), dtype=jnp.float32)
    loss3 = policy_loss(q3, tile_rows=8, small_max_elems=0)
    jax.block_until_ready(loss3)
    ref3 = -jnp.mean(q3)
    assert jnp.allclose(loss3, ref3, atol=1e-5, rtol=1e-5), (loss3, ref3)

    # 4) Tiled path: even block count -> two parallel slices, zero-copy
    #    reshape (size % 128 == 0), no masking.
    q4 = jax.random.normal(k4, (2048, 1), dtype=jnp.float32)
    loss4 = policy_loss(q4, tile_rows=8, small_max_elems=0)
    jax.block_until_ready(loss4)
    ref4 = -jnp.mean(q4)
    assert jnp.allclose(loss4, ref4, atol=1e-5, rtol=1e-5), (loss4, ref4)

    # 5) Tiled path: two parallel slices WITH tail-row masking.
    q5 = jax.random.normal(k5, (1536, 1), dtype=jnp.float32)
    loss5 = policy_loss(q5, tile_rows=8, small_max_elems=0)
    jax.block_until_ready(loss5)
    ref5 = -jnp.mean(q5)
    assert jnp.allclose(loss5, ref5, atol=1e-5, rtol=1e-5), (loss5, ref5)

    print("KERNEL_OK")
</pallas_src>

<mosaic_0001>
module attributes {stable_mosaic.version = 11 : i64} {
  func.func @_single_block_kernel(%arg0: i32, %arg1: memref<64x1xf32, #tpu.memory_space<vmem>>, %arg2: memref<1x1xf32, #tpu.memory_space<smem>>) attributes {dimension_semantics = [#tpu.dimension_semantics<arbitrary>], iteration_bounds = array<i64: 1>, scalar_prefetch = 0 : i64, scratch_operands = 0 : i64, tpu.core_type = #tpu.core_type<tc>, window_params = [{pipeline_mode = #tpu.pipeline_mode<synchronous>, transform_indices = @transform_0, window_bounds = array<i64: 64, 1>}, {transform_indices = @transform_1, window_bounds = array<i64: 1, 1>}]} {
    %c0 = arith.constant 0 : index
    %c0_0 = arith.constant 0 : index
    %0 = vector.load %arg1[%c0, %c0_0] : memref<64x1xf32, #tpu.memory_space<vmem>>, vector<64x1xf32>
    %1 = vector.shape_cast %0 : vector<64x1xf32> to vector<1x64x1xf32>
    %cst = arith.constant dense<0.000000e+00> : vector<1xf32>
    %2 = vector.multi_reduction <add>, %1, %cst [1, 2] : vector<1x64x1xf32> to vector<1xf32>
    %3 = vector.shape_cast %2 : vector<1xf32> to vector<1x1x1xf32>
    %4 = vector.extract %3[0, 0, 0] : f32 from vector<1x1x1xf32>
    %cst_1 = arith.constant -1.562500e-02 : f32
    %5 = arith.mulf %4, %cst_1 : f32
    %c0_2 = arith.constant 0 : index
    %c0_3 = arith.constant 0 : index
    %6 = memref.load %arg2[%c0_2, %c0_3] : memref<1x1xf32, #tpu.memory_space<smem>>
    memref.store %5, %arg2[%c0_2, %c0_3] : memref<1x1xf32, #tpu.memory_space<smem>>
    return
  }
  func.func @transform_0(%arg0: i32) -> (i32, i32) {
    %c0_i32 = arith.constant 0 : i32
    %c0_i32_0 = arith.constant 0 : i32
    %c0_i32_1 = arith.constant 0 : i32
    return %c0_i32, %c0_i32_0 : i32, i32
  }
  func.func @transform_1(%arg0: i32) -> (i32, i32) {
    %c0_i32 = arith.constant 0 : i32
    %c0_i32_0 = arith.constant 0 : i32
    %c0_i32_1 = arith.constant 0 : i32
    return %c0_i32, %c0_i32_0 : i32, i32
  }
}

</mosaic_0001>

<llo_original>
// kernel: tpu_custom_call.1
$region0: #{tpu_custom_call.1}
  #allocation0 [shape = 'u32[]', space=smem, size = 0x4, offset = 0x4, fixed_abs, tag = 'smem constant byte address 0x4 - core index']
  #allocation1 [shape = 'u32[144,128]{1,0:T(1,128)}', space=vmem, size = 0x12000, scoped, tag = 'internal scratch']
  %s0 = inlined_call_operand.vmem [shape: f32[64,1], index: 0, kind: input, shape index: {}]
  %s1 = inlined_call_operand.hbm [shape: f32[1,1], index: 1, kind: output, shape index: {}]
  %s2 = sld [smem:[#allocation0]]
  $region14: #{tpu_custom_call.1} parent=0
    _
  %s4 = ssub.s32 1, %s2
  %s5 = scalar_select 0, %s4, %s2
  $region1: #{tpu_custom_call.1} parent=0
    #allocation2 [shape = 'u8[512]{0}', space=smem, size = 0x200, scoped, tag = 'output window, operand 0, single buffered']
    #allocation3 [shape = 's32[1]{0}', space=sflag, size = 0x4, scoped, tag = 'scoped memory for tpu_custom_call.1']
    %6 = vsyncpa [#allocation3], 0
    // Predicated region
    $region2: #{tpu_custom_call.1} parent=1 // pred_check
      _
    $region3: #{tpu_custom_call.1} parent=1 // pred_check_branch
      %8 = sbr.rel (0) target = $region5
    $region4: #{tpu_custom_call.1} parent=1 // pred_region
      _
    $region5: #{tpu_custom_call.1} parent=1 // pred_fallthru
      _
    %v9 = vld [vmem:[%s0] sm:$0xff]
    %v10 = vld [vmem:[%s0 + $0x8] sm:$0xff]
    %v11 = vld [vmem:[%s0 + $0x10] sm:$0xff]
    %v12 = vld [vmem:[%s0 + $0x18] sm:$0xff]
    %v13 = vld [vmem:[%s0 + $0x20] sm:$0xff]
    %v14 = vld [vmem:[%s0 + $0x28] sm:$0xff]
    %v15 = vld [vmem:[%s0 + $0x30] sm:$0xff]
    %v16 = vld [vmem:[%s0 + $0x38] sm:$0xff]
    %vm17 = vcmask 7168
    %v18 = vsel %vm17, %v9, 0.0
    %v19 = vsel %vm17, %v10, 0.0
    %v20 = vadd.f32 %v18, %v19
    %v21 = vsel %vm17, %v11, 0.0
    %v22 = vadd.f32 %v20, %v21
    %v23 = vsel %vm17, %v12, 0.0
    %v24 = vadd.f32 %v22, %v23
    %v25 = vsel %vm17, %v13, 0.0
    %v26 = vadd.f32 %v24, %v25
    %v27 = vsel %vm17, %v14, 0.0
    %v28 = vadd.f32 %v26, %v27
    %v29 = vsel %vm17, %v15, 0.0
    %v30 = vadd.f32 %v28, %v29
    %v31 = vsel %vm17, %v16, 0.0
    %v32 = vadd.f32 %v30, %v31
    %33 = vadd.xlane.f32.xlu0 %v32
    %v34 = vpop.xlane.xlu0 %33
    %v35 = vrot.slane %v34, 4
    %v36 = vadd.f32 %v34, %v35
    %v37 = vrot.slane %v36, 2
    %v38 = vadd.f32 %v36, %v37
    %v39 = vrot.slane %v38, 1
    %v40 = vadd.f32 %v38, %v39
    %s41 = vtos %v40
    %s42 = smul.f32 %s41, -0.015625
    %s43 = scalar_lea.smem [#allocation2], 0
    %44 = sst [smem:[%s43]] %s42
    // Predicated region
    $region6: #{tpu_custom_call.1} parent=1 // pred_check
      _
    $region7: #{tpu_custom_call.1} parent=1 // pred_check_branch
      %46 = sbr.rel (0) target = $region9
    $region8: #{tpu_custom_call.1} parent=1 // pred_region
      %s48 = ssub.s32 16, 16
      %49 = vsyncadd [#allocation3], %s48
      %52 = dma.smem_to_hbm [#allocation2], 16, %s1, [#allocation3]
    $region9: #{tpu_custom_call.1} parent=1 // pred_fallthru
      _
    // Predicated region
    $region10: #{tpu_custom_call.1} parent=1 // pred_check
      _
    $region11: #{tpu_custom_call.1} parent=1 // pred_check_branch
      %54 = sbr.rel (0) target = $region13
    $region12: #{tpu_custom_call.1} parent=1 // pred_region
      %55 = dma.done [#allocation3], 16
    $region13: #{tpu_custom_call.1} parent=1 // pred_fallthru
      _
    %56 = sfence
    %57 = vsyncpa [#allocation3], 1

</llo_original>
